<compile_context>
chip_gen: v7x
topology: tpu7x:2x2x1
jax: 0.10.0
libtpu: 0.0.40
codegen_flags: <defaults>
</compile_context>

<pallas_src>
import functools

import jax
import jax.numpy as jnp
from jax.experimental import pallas as pl
from jax.experimental.pallas import tpu as pltpu

_LANE = 128
_MIB = 1024 * 1024


def _round_up(x, m):
    return (x + m - 1) // m * m


def _chip_profile():
    """Returns (num_tensorcores, scoped_vmem_default_bytes, vmem_cap_bytes)."""
    kind = ""
    try:
        kind = jax.devices()[0].device_kind.lower()
    except Exception:
        pass
    if "v7" in kind:
        # v7x: 2 TCs/chip, only 64 MiB physical VMEM/TC -> leave scratch headroom.
        return 2, 32 * _MIB, 56 * _MIB
    if "v6" in kind:
        return 1, 32 * _MIB, 100 * _MIB
    if "v5 lite" in kind or "v5lite" in kind or "v5e" in kind:
        return 1, 16 * _MIB, 100 * _MIB
    if "v5p" in kind or "v4" in kind:
        return 2, 16 * _MIB, 48 * _MIB
    if "v5" in kind:
        return 1, 16 * _MIB, 100 * _MIB
    # Unknown chip: conservative assumptions.
    return 2, 16 * _MIB, 48 * _MIB


def _padded_tile_bytes(rows, cols, dtype):
    """Bytes a (rows, cols) block actually occupies in VMEM ((sublane,128) padded)."""
    d = jnp.dtype(dtype)
    sublane = 8 * max(1, 4 // d.itemsize)          # 8 for f32, 16 for bf16
    r = _round_up(max(int(rows), 1), sublane)
    c = _round_up(max(int(cols), 1), _LANE)
    return r * c * d.itemsize


def _vmem_budget_bytes(tile_b, cin, hidden, cout, x_dtype, compute_dtype, out_dtype):
    """Tile-padding-aware VMEM estimate for one grid step."""
    total = 2 * _padded_tile_bytes(tile_b, cin, x_dtype)      # x block, double-buffered
    total += 2 * _padded_tile_bytes(tile_b, cout, out_dtype)  # out block, double-buffered
    layer_dims = [(cin, hidden), (hidden, 2 * hidden),
                  (2 * hidden, hidden), (hidden, cout)]
    for fi, fo in layer_dims:
        total += 2 * _padded_tile_bytes(fi, fo, compute_dtype)  # weights (worst-case x2)
        total += 2 * _padded_tile_bytes(1, fo, jnp.float32)     # biases
        total += _padded_tile_bytes(tile_b, fo, jnp.float32)    # fused f32 intermediate
    # Cast copy of the input block + compiler scratch slack.
    total += _padded_tile_bytes(tile_b, cin, compute_dtype)
    total += 2 * _MIB
    return total


def _pick_tile_b(B, *, num_tc, vmem_cap, cin, hidden, cout,
                 x_dtype, compute_dtype, out_dtype):
    """Largest power-of-two row tile that fits VMEM and gives enough grid steps.

    2-TC chips (v7x): want >= 2 steps per core so the x DMA overlaps compute.
    1-TC chips (v5e/v6e): splitting only adds per-step overhead, so prefer one
    big tile (cap 8192 rows).
    """
    sublane = 8 * max(1, 4 // jnp.dtype(x_dtype).itemsize)
    max_tile = 1024 if num_tc > 1 else 8192
    min_steps = 2 * num_tc if num_tc > 1 else 1
    cands = [t for t in (8192, 4096, 2048, 1024, 512, 256, 128, 64, 32, 16, 8)
             if t <= max_tile and t % sublane == 0]

    def fits(t):
        return _vmem_budget_bytes(t, cin, hidden, cout, x_dtype,
                                  compute_dtype, out_dtype) <= vmem_cap

    for steps_req in sorted({min_steps, 2, 1}, reverse=True):
        for t in cands:
            if t > B:
                continue
            if pl.cdiv(B, t) < steps_req:
                continue
            if not fits(t):
                continue
            return t
    # Tiny batch: single full-array block (exempt from sublane constraints).
    return B


def _bp_pid_kernel(x_ref,
                   w1_ref, b1_ref,
                   w2_ref, b2_ref,
                   w3_ref, b3_ref,
                   w4_ref, b4_ref,
                   o_ref, *, compute_dtype):
    def layer(h, w_ref, b_ref):
        # matmul operands cast to compute_dtype (free on the VPU); accumulate in
        # f32 on the MXU, bias add + ReLU on the VPU in f32.
        y = jnp.dot(h.astype(compute_dtype), w_ref[...],
                    preferred_element_type=jnp.float32)
        return jnp.maximum(y + b_ref[...], 0.0)

    h = layer(x_ref[...], w1_ref, b1_ref)   # inputlayer:       Linear + ReLU
    h = layer(h, w2_ref, b2_ref)            # hiddenlayers[0]:  Linear + ReLU
    h = layer(h, w3_ref, b3_ref)            # hiddenlayers[2]:  Linear + ReLU
    h = layer(h, w4_ref, b4_ref)            # outputlayer:      Linear + ReLU
    o_ref[...] = h.astype(o_ref.dtype)


def bp_pid_forward(x, params, *, tile_b=None, compute_dtype=jnp.bfloat16):
    """x: (B, inputchannels). params: (in,out) weights, (1,out) biases."""
    B, cin = x.shape
    out_dtype = x.dtype

    w1, b1 = params["w1"], params["b1"]
    w2, b2 = params["w2"], params["b2"]
    w3, b3 = params["w3"], params["b3"]
    w4, b4 = params["w4"], params["b4"]
    hidden = w1.shape[1]
    cout = w4.shape[1]

    num_tc, scoped_default, vmem_cap = _chip_profile()
    if tile_b is None:
        tile_b = _pick_tile_b(B, num_tc=num_tc, vmem_cap=vmem_cap,
                              cin=cin, hidden=hidden, cout=cout,
                              x_dtype=x.dtype, compute_dtype=compute_dtype,
                              out_dtype=out_dtype)

    # Non-divisible batch: zero-pad rows, slice the result afterwards.
    B_pad = _round_up(B, tile_b)
    x_in = x if B_pad == B else jnp.pad(x, ((0, B_pad - B), (0, 0)))
    grid = B_pad // tile_b

    # Pre-cast only the tiny, one-time weights; x is cast in-kernel.
    w1c, w2c, w3c, w4c = (w.astype(compute_dtype) for w in (w1, w2, w3, w4))

    # Weights/biases: block == full array, constant block index -> VMEM-resident
    # across all grid steps (DMA'd once).
    full2d = lambda arr: pl.BlockSpec(arr.shape, lambda i: (0, 0))

    cparams = dict(dimension_semantics=("parallel",))
    vmem_needed = _vmem_budget_bytes(tile_b, cin, hidden, cout,
                                     x.dtype, compute_dtype, out_dtype)
    if vmem_needed > scoped_default:
        cparams["vmem_limit_bytes"] = int(min(vmem_needed * 1.25, vmem_cap))

    out = pl.pallas_call(
        functools.partial(_bp_pid_kernel, compute_dtype=compute_dtype),
        out_shape=jax.ShapeDtypeStruct((B_pad, cout), out_dtype),
        grid_spec=pltpu.PrefetchScalarGridSpec(
            num_scalar_prefetch=0,
            grid=(grid,),
            in_specs=[
                pl.BlockSpec((tile_b, cin), lambda i: (i, 0)),
                full2d(w1c), full2d(b1),
                full2d(w2c), full2d(b2),
                full2d(w3c), full2d(b3),
                full2d(w4c), full2d(b4),
            ],
            out_specs=pl.BlockSpec((tile_b, cout), lambda i: (i, 0)),
        ),
        compiler_params=pltpu.CompilerParams(**cparams),
    )(x_in, w1c, b1, w2c, b2, w3c, b3, w4c, b4)

    return out if B_pad == B else out[:B]


def init_params(key, inputchannels, hiddenchannel, outputchannels):
    """nn.Linear-style init U(-1/sqrt(fan_in), 1/sqrt(fan_in)); W stored (in,out)."""
    dims = [
        (inputchannels, hiddenchannel),
        (hiddenchannel, hiddenchannel * 2),
        (hiddenchannel * 2, hiddenchannel),
        (hiddenchannel, outputchannels),
    ]
    params = {}
    keys = jax.random.split(key, 2 * len(dims))
    for idx, (fan_in, fan_out) in enumerate(dims):
        bound = 1.0 / (fan_in ** 0.5)
        params[f"w{idx + 1}"] = jax.random.uniform(
            keys[2 * idx], (fan_in, fan_out),
            minval=-bound, maxval=bound, dtype=jnp.float32)
        params[f"b{idx + 1}"] = jax.random.uniform(
            keys[2 * idx + 1], (1, fan_out),
            minval=-bound, maxval=bound, dtype=jnp.float32)
    return params


def reference_forward(x, p):
    h = jnp.maximum(x @ p["w1"] + p["b1"], 0.0)
    h = jnp.maximum(h @ p["w2"] + p["b2"], 0.0)
    h = jnp.maximum(h @ p["w3"] + p["b3"], 0.0)
    return jnp.maximum(h @ p["w4"] + p["b4"], 0.0)


if __name__ == "__main__":
    inputchannels, hiddenchannel, outputchannels = 4, 32, 3
    batch = 16

    key = jax.random.PRNGKey(0)
    kx, kp = jax.random.split(key)
    x = jax.random.normal(kx, (batch, inputchannels), dtype=jnp.float32)
    params = init_params(kp, inputchannels, hiddenchannel, outputchannels)

    ref = reference_forward(x, params)

    # f32 matmul path (exact match vs reference).
    out_f32 = bp_pid_forward(x, params, compute_dtype=jnp.float32)
    out_f32 = jax.block_until_ready(out_f32)
    assert out_f32.shape == (batch, outputchannels)
    assert jnp.allclose(out_f32, ref, atol=1e-5, rtol=1e-5)

    # Default bf16 matmul path (f32 accumulation); loose tolerance sanity check.
    out_bf16 = bp_pid_forward(x, params)
    out_bf16 = jax.block_until_ready(out_bf16)
    assert out_bf16.shape == (batch, outputchannels)
    assert bool(jnp.all(jnp.isfinite(out_bf16)))
    assert float(jnp.max(jnp.abs(out_bf16 - ref))) < 0.25 * (1.0 + float(jnp.max(jnp.abs(ref))))

    print("KERNEL_OK")
</pallas_src>

<mosaic_0001>
module attributes {stable_mosaic.version = 11 : i64} {
  func.func @_bp_pid_kernel(%arg0: i32, %arg1: memref<8x4xf32, #tpu.memory_space<vmem>>, %arg2: memref<4x32xf32, #tpu.memory_space<vmem>>, %arg3: memref<1x32xf32, #tpu.memory_space<vmem>>, %arg4: memref<32x64xf32, #tpu.memory_space<vmem>>, %arg5: memref<1x64xf32, #tpu.memory_space<vmem>>, %arg6: memref<64x32xf32, #tpu.memory_space<vmem>>, %arg7: memref<1x32xf32, #tpu.memory_space<vmem>>, %arg8: memref<32x3xf32, #tpu.memory_space<vmem>>, %arg9: memref<1x3xf32, #tpu.memory_space<vmem>>, %arg10: memref<8x3xf32, #tpu.memory_space<vmem>>) attributes {dimension_semantics = [#tpu.dimension_semantics<parallel>], iteration_bounds = array<i64: 2>, scalar_prefetch = 0 : i64, scratch_operands = 0 : i64, tpu.core_type = #tpu.core_type<tc>, window_params = [{transform_indices = @transform_0, window_bounds = array<i64: 8, 4>}, {pipeline_mode = #tpu.pipeline_mode<synchronous>, transform_indices = @transform_1, window_bounds = array<i64: 4, 32>}, {pipeline_mode = #tpu.pipeline_mode<synchronous>, transform_indices = @transform_2, window_bounds = array<i64: 1, 32>}, {pipeline_mode = #tpu.pipeline_mode<synchronous>, transform_indices = @transform_3, window_bounds = array<i64: 32, 64>}, {pipeline_mode = #tpu.pipeline_mode<synchronous>, transform_indices = @transform_4, window_bounds = array<i64: 1, 64>}, {pipeline_mode = #tpu.pipeline_mode<synchronous>, transform_indices = @transform_5, window_bounds = array<i64: 64, 32>}, {pipeline_mode = #tpu.pipeline_mode<synchronous>, transform_indices = @transform_6, window_bounds = array<i64: 1, 32>}, {pipeline_mode = #tpu.pipeline_mode<synchronous>, transform_indices = @transform_7, window_bounds = array<i64: 32, 3>}, {pipeline_mode = #tpu.pipeline_mode<synchronous>, transform_indices = @transform_8, window_bounds = array<i64: 1, 3>}, {transform_indices = @transform_9, window_bounds = array<i64: 8, 3>}]} {
    %c0 = arith.constant 0 : index
    %c0_0 = arith.constant 0 : index
    %0 = vector.load %arg1[%c0, %c0_0] : memref<8x4xf32, #tpu.memory_space<vmem>>, vector<8x4xf32>
    %c0_1 = arith.constant 0 : index
    %c0_2 = arith.constant 0 : index
    %1 = vector.load %arg2[%c0_1, %c0_2] : memref<4x32xf32, #tpu.memory_space<vmem>>, vector<4x32xf32>
    %cst = arith.constant dense<0.000000e+00> : vector<8x32xf32>
    %2 = tpu.matmul %0, %1, %cst {dimension_numbers = #tpu.dot_dimension_numbers<[1], [0], [0], [1], [0, 0, 1, 1], [], []>} : vector<8x4xf32>, vector<4x32xf32>, vector<8x32xf32> -> vector<8x32xf32>
    %c0_3 = arith.constant 0 : index
    %c0_4 = arith.constant 0 : index
    %3 = vector.load %arg3[%c0_3, %c0_4] : memref<1x32xf32, #tpu.memory_space<vmem>>, vector<1x32xf32>
    %4 = vector.broadcast %3 : vector<1x32xf32> to vector<8x32xf32>
    %5 = arith.addf %2, %4 : vector<8x32xf32>
    %cst_5 = arith.constant 0.000000e+00 : f32
    %6 = vector.broadcast %cst_5 : f32 to vector<8x32xf32>
    %7 = arith.maximumf %5, %6 : vector<8x32xf32>
    %c0_6 = arith.constant 0 : index
    %c0_7 = arith.constant 0 : index
    %8 = vector.load %arg4[%c0_6, %c0_7] : memref<32x64xf32, #tpu.memory_space<vmem>>, vector<32x64xf32>
    %cst_8 = arith.constant dense<0.000000e+00> : vector<8x64xf32>
    %9 = tpu.matmul %7, %8, %cst_8 {dimension_numbers = #tpu.dot_dimension_numbers<[1], [0], [0], [1], [0, 0, 1, 1], [], []>} : vector<8x32xf32>, vector<32x64xf32>, vector<8x64xf32> -> vector<8x64xf32>
    %c0_9 = arith.constant 0 : index
    %c0_10 = arith.constant 0 : index
    %10 = vector.load %arg5[%c0_9, %c0_10] : memref<1x64xf32, #tpu.memory_space<vmem>>, vector<1x64xf32>
    %11 = vector.broadcast %10 : vector<1x64xf32> to vector<8x64xf32>
    %12 = arith.addf %9, %11 : vector<8x64xf32>
    %cst_11 = arith.constant 0.000000e+00 : f32
    %13 = vector.broadcast %cst_11 : f32 to vector<8x64xf32>
    %14 = arith.maximumf %12, %13 : vector<8x64xf32>
    %c0_12 = arith.constant 0 : index
    %c0_13 = arith.constant 0 : index
    %15 = vector.load %arg6[%c0_12, %c0_13] : memref<64x32xf32, #tpu.memory_space<vmem>>, vector<64x32xf32>
    %cst_14 = arith.constant dense<0.000000e+00> : vector<8x32xf32>
    %16 = tpu.matmul %14, %15, %cst_14 {dimension_numbers = #tpu.dot_dimension_numbers<[1], [0], [0], [1], [0, 0, 1, 1], [], []>} : vector<8x64xf32>, vector<64x32xf32>, vector<8x32xf32> -> vector<8x32xf32>
    %c0_15 = arith.constant 0 : index
    %c0_16 = arith.constant 0 : index
    %17 = vector.load %arg7[%c0_15, %c0_16] : memref<1x32xf32, #tpu.memory_space<vmem>>, vector<1x32xf32>
    %18 = vector.broadcast %17 : vector<1x32xf32> to vector<8x32xf32>
    %19 = arith.addf %16, %18 : vector<8x32xf32>
    %cst_17 = arith.constant 0.000000e+00 : f32
    %20 = vector.broadcast %cst_17 : f32 to vector<8x32xf32>
    %21 = arith.maximumf %19, %20 : vector<8x32xf32>
    %c0_18 = arith.constant 0 : index
    %c0_19 = arith.constant 0 : index
    %22 = vector.load %arg8[%c0_18, %c0_19] : memref<32x3xf32, #tpu.memory_space<vmem>>, vector<32x3xf32>
    %cst_20 = arith.constant dense<0.000000e+00> : vector<8x3xf32>
    %23 = tpu.matmul %21, %22, %cst_20 {dimension_numbers = #tpu.dot_dimension_numbers<[1], [0], [0], [1], [0, 0, 1, 1], [], []>} : vector<8x32xf32>, vector<32x3xf32>, vector<8x3xf32> -> vector<8x3xf32>
    %c0_21 = arith.constant 0 : index
    %c0_22 = arith.constant 0 : index
    %24 = vector.load %arg9[%c0_21, %c0_22] : memref<1x3xf32, #tpu.memory_space<vmem>>, vector<1x3xf32>
    %25 = vector.broadcast %24 : vector<1x3xf32> to vector<8x3xf32>
    %26 = arith.addf %23, %25 : vector<8x3xf32>
    %cst_23 = arith.constant 0.000000e+00 : f32
    %27 = vector.broadcast %cst_23 : f32 to vector<8x3xf32>
    %28 = arith.maximumf %26, %27 : vector<8x3xf32>
    %c0_24 = arith.constant 0 : index
    %c0_25 = arith.constant 0 : index
    %29 = vector.load %arg10[%c0_24, %c0_25] : memref<8x3xf32, #tpu.memory_space<vmem>>, vector<8x3xf32>
    tpu.vector_store %arg10[%c0_24, %c0_25], %28 {strides = array<i32>} : memref<8x3xf32, #tpu.memory_space<vmem>>, vector<8x3xf32>,
    return
  }
  func.func @transform_0(%arg0: i32) -> (i32, i32) {
    %c0_i32 = arith.constant 0 : i32
    %c0_i32_0 = arith.constant 0 : i32
    return %arg0, %c0_i32 : i32, i32
  }
  func.func @transform_1(%arg0: i32) -> (i32, i32) {
    %c0_i32 = arith.constant 0 : i32
    %c0_i32_0 = arith.constant 0 : i32
    %c0_i32_1 = arith.constant 0 : i32
    return %c0_i32, %c0_i32_0 : i32, i32
  }
  func.func @transform_2(%arg0: i32) -> (i32, i32) {
    %c0_i32 = arith.constant 0 : i32
    %c0_i32_0 = arith.constant 0 : i32
    %c0_i32_1 = arith.constant 0 : i32
    return %c0_i32, %c0_i32_0 : i32, i32
  }
  func.func @transform_3(%arg0: i32) -> (i32, i32) {
    %c0_i32 = arith.constant 0 : i32
    %c0_i32_0 = arith.constant 0 : i32
    %c0_i32_1 = arith.constant 0 : i32
    return %c0_i32, %c0_i32_0 : i32, i32
  }
  func.func @transform_4(%arg0: i32) -> (i32, i32) {
    %c0_i32 = arith.constant 0 : i32
    %c0_i32_0 = arith.constant 0 : i32
    %c0_i32_1 = arith.constant 0 : i32
    return %c0_i32, %c0_i32_0 : i32, i32
  }
  func.func @transform_5(%arg0: i32) -> (i32, i32) {
    %c0_i32 = arith.constant 0 : i32
    %c0_i32_0 = arith.constant 0 : i32
    %c0_i32_1 = arith.constant 0 : i32
    return %c0_i32, %c0_i32_0 : i32, i32
  }
  func.func @transform_6(%arg0: i32) -> (i32, i32) {
    %c0_i32 = arith.constant 0 : i32
    %c0_i32_0 = arith.constant 0 : i32
    %c0_i32_1 = arith.constant 0 : i32
    return %c0_i32, %c0_i32_0 : i32, i32
  }
  func.func @transform_7(%arg0: i32) -> (i32, i32) {
    %c0_i32 = arith.constant 0 : i32
    %c0_i32_0 = arith.constant 0 : i32
    %c0_i32_1 = arith.constant 0 : i32
    return %c0_i32, %c0_i32_0 : i32, i32
  }
  func.func @transform_8(%arg0: i32) -> (i32, i32) {
    %c0_i32 = arith.constant 0 : i32
    %c0_i32_0 = arith.constant 0 : i32
    %c0_i32_1 = arith.constant 0 : i32
    return %c0_i32, %c0_i32_0 : i32, i32
  }
  func.func @transform_9(%arg0: i32) -> (i32, i32) {
    %c0_i32 = arith.constant 0 : i32
    %c0_i32_0 = arith.constant 0 : i32
    return %arg0, %c0_i32 : i32, i32
  }
}

</mosaic_0001>

<llo_original>
// kernel: tpu_custom_call.1
$region0: #{tpu_custom_call.1}
  #allocation0 [shape = 'u32[]', space=smem, size = 0x4, offset = 0x4, fixed_abs, tag = 'smem constant byte address 0x4 - core index']
  #allocation1 [shape = 'u32[144,128]{1,0:T(1,128)}', space=vmem, size = 0x12000, scoped, tag = 'internal scratch']
  %s0 = inlined_call_operand.vmem [shape: f32[16,4], index: 0, kind: input, shape index: {}]
  %s1 = inlined_call_operand.vmem [shape: f32[4,32], index: 1, kind: input, shape index: {}]
  %s2 = inlined_call_operand.vmem [shape: f32[1,32], index: 2, kind: input, shape index: {}]
  %s3 = inlined_call_operand.vmem [shape: f32[32,64], index: 3, kind: input, shape index: {}]
  %s4 = inlined_call_operand.vmem [shape: f32[1,64], index: 4, kind: input, shape index: {}]
  %s5 = inlined_call_operand.vmem [shape: f32[64,32], index: 5, kind: input, shape index: {}]
  %s6 = inlined_call_operand.vmem [shape: f32[1,32], index: 6, kind: input, shape index: {}]
  %s7 = inlined_call_operand.vmem [shape: f32[32,3], index: 7, kind: input, shape index: {}]
  %s8 = inlined_call_operand.vmem [shape: f32[1,3], index: 8, kind: input, shape index: {}]
  %s9 = inlined_call_operand.vmem [shape: f32[16,3], index: 9, kind: output, shape index: {}]
  %s10 = sld [smem:[#allocation0]]
  $region69: #{tpu_custom_call.1} parent=0
    _
  %s12 = ssub.s32 1, %s10
  %s13 = scalar_select 0, %s12, %s10
  loop: start=0, step=1, limit=4
  $region2: #{tpu_custom_call.1} parent=0 // loop_pre_header
    _
  $region3: #{tpu_custom_call.1} parent=0 // loop_header
    %s15 = sphi 0, %s19
    %p16 = scmp.ge.s32.totalorder %s15, 4
    %s25 = sphi 0, %s27
    %s28 = sphi 0, %s25
    %s29 = sphi 0, %s28
    %s45 = sphi 0, %s29
    %s49 = sphi 0, %s49
    %s51 = sphi 0, %s49
    %s52 = sphi 0, %s51
    %s66 = sphi 0, %s52
    %s70 = sphi 0, %s70
    %s72 = sphi 0, %s70
    %s73 = sphi 0, %s72
    %s87 = sphi 0, %s73
    %s91 = sphi 0, %s91
    %s93 = sphi 0, %s91
    %s94 = sphi 0, %s93
    %s108 = sphi 0, %s94
    %s112 = sphi 0, %s112
    %s114 = sphi 0, %s112
    %s115 = sphi 0, %s114
    %s129 = sphi 0, %s115
    %s133 = sphi 0, %s133
    %s135 = sphi 0, %s133
    %s136 = sphi 0, %s135
    %s150 = sphi 0, %s136
    %s154 = sphi 0, %s154
    %s156 = sphi 0, %s154
    %s157 = sphi 0, %s156
    %s171 = sphi 0, %s157
    %s175 = sphi 0, %s175
    %s177 = sphi 0, %s175
    %s178 = sphi 0, %s177
    %s192 = sphi 0, %s178
    %s196 = sphi 0, %s196
    %s198 = sphi 0, %s196
    %s199 = sphi 0, %s198
    %s213 = sphi 0, %s199
    %s219 = sphi 0, %s221
    %s222 = sphi 0, %s219
    %s223 = sphi 0, %s222
    %s239 = sphi 0, %s223
  $region4: #{tpu_custom_call.1} parent=0 // loop_header_branch
    %18 = sbr.rel (%p16) target = $region8
  $region5: #{tpu_custom_call.1} parent=0 // loop_body
    %s20 = ssub.s32 %s15, 1
    %s21 = ssub.s32 %s15, 2
    %s22 = sadd.s32 %s15, 1
    %s23 = ssub.s32 %s15, %s22
    %p24 = scmp.eq.s32.totalorder %s23, 0
    %s26 = sadd.s32 %s25, 1
    %s27 = scalar_select %p24, %s25, %s26
    %p30 = pneg %p24
    %p31 = scmp.eq.s32.totalorder %s15, 1
    %p32 = por %p30, %p31
    %p33 = scmp.ne.s32.totalorder %s25, %s28
    %p34 = scmp.eq.s32.totalorder %s15, 0
    %p35 = por %p33, %p34
    %p36 = scmp.ne.s32.totalorder %s25, %s28
    %p37 = scmp.eq.s32.totalorder %s20, 1
    %p38 = por %p36, %p37
    %p39 = scmp.ne.s32.totalorder %s28, %s29
    %p40 = scmp.eq.s32.totalorder %s20, 0
    %p41 = por %p39, %p40
    %p42 = scmp.ne.s32.totalorder %s28, %s29
    %p43 = scmp.eq.s32.totalorder %s21, 1
    %p44 = por %p42, %p43
    %p46 = scmp.ne.s32.totalorder %s29, %s45
    %p47 = scmp.eq.s32.totalorder %s21, 0
    %p48 = por %p46, %p47
    %s50 = sadd.s32 %s49, 1
    %p53 = scmp.eq.s32.totalorder %s15, 1
    %p54 = scmp.ne.s32.totalorder %s49, %s51
    %p55 = scmp.eq.s32.totalorder %s15, 0
    %p56 = por %p54, %p55
    %p57 = scmp.ne.s32.totalorder %s49, %s51
    %p58 = scmp.eq.s32.totalorder %s20, 1
    %p59 = por %p57, %p58
    %p60 = scmp.ne.s32.totalorder %s51, %s52
    %p61 = scmp.eq.s32.totalorder %s20, 0
    %p62 = por %p60, %p61
    %p63 = scmp.ne.s32.totalorder %s51, %s52
    %p64 = scmp.eq.s32.totalorder %s21, 1
    %p65 = por %p63, %p64
    %p67 = scmp.ne.s32.totalorder %s52, %s66
    %p68 = scmp.eq.s32.totalorder %s21, 0
    %p69 = por %p67, %p68
    %s71 = sadd.s32 %s70, 1
    %p74 = scmp.eq.s32.totalorder %s15, 1
    %p75 = scmp.ne.s32.totalorder %s70, %s72
    %p76 = scmp.eq.s32.totalorder %s15, 0
    %p77 = por %p75, %p76
    %p78 = scmp.ne.s32.totalorder %s70, %s72
    %p79 = scmp.eq.s32.totalorder %s20, 1
    %p80 = por %p78, %p79
    %p81 = scmp.ne.s32.totalorder %s72, %s73
    %p82 = scmp.eq.s32.totalorder %s20, 0
    %p83 = por %p81, %p82
    %p84 = scmp.ne.s32.totalorder %s72, %s73
    %p85 = scmp.eq.s32.totalorder %s21, 1
    %p86 = por %p84, %p85
    %p88 = scmp.ne.s32.totalorder %s73, %s87
    %p89 = scmp.eq.s32.totalorder %s21, 0
    %p90 = por %p88, %p89
    %s92 = sadd.s32 %s91, 1
    %p95 = scmp.eq.s32.totalorder %s15, 1
    %p96 = scmp.ne.s32.totalorder %s91, %s93
    %p97 = scmp.eq.s32.totalorder %s15, 0
    %p98 = por %p96, %p97
    %p99 = scmp.ne.s32.totalorder %s91, %s93
    %p100 = scmp.eq.s32.totalorder %s20, 1
    %p101 = por %p99, %p100
    %p102 = scmp.ne.s32.totalorder %s93, %s94
    %p103 = scmp.eq.s32.totalorder %s20, 0
    %p104 = por %p102, %p103
    %p105 = scmp.ne.s32.totalorder %s93, %s94
    %p106 = scmp.eq.s32.totalorder %s21, 1
    %p107 = por %p105, %p106
    %p109 = scmp.ne.s32.totalorder %s94, %s108
    %p110 = scmp.eq.s32.totalorder %s21, 0
    %p111 = por %p109, %p110
    %s113 = sadd.s32 %s112, 1
    %p116 = scmp.eq.s32.totalorder %s15, 1
    %p117 = scmp.ne.s32.totalorder %s112, %s114
    %p118 = scmp.eq.s32.totalorder %s15, 0
    %p119 = por %p117, %p118
    %p120 = scmp.ne.s32.totalorder %s112, %s114
    %p121 = scmp.eq.s32.totalorder %s20, 1
    %p122 = por %p120, %p121
    %p123 = scmp.ne.s32.totalorder %s114, %s115
    %p124 = scmp.eq.s32.totalorder %s20, 0
    %p125 = por %p123, %p124
    %p126 = scmp.ne.s32.totalorder %s114, %s115
    %p127 = scmp.eq.s32.totalorder %s21, 1
    %p128 = por %p126, %p127
    %p130 = scmp.ne.s32.totalorder %s115, %s129
    %p131 = scmp.eq.s32.totalorder %s21, 0
    %p132 = por %p130, %p131
    %s134 = sadd.s32 %s133, 1
    %p137 = scmp.eq.s32.totalorder %s15, 1
    %p138 = scmp.ne.s32.totalorder %s133, %s135
    %p139 = scmp.eq.s32.totalorder %s15, 0
    %p140 = por %p138, %p139
    %p141 = scmp.ne.s32.totalorder %s133, %s135
    %p142 = scmp.eq.s32.totalorder %s20, 1
    %p143 = por %p141, %p142
    %p144 = scmp.ne.s32.totalorder %s135, %s136
    %p145 = scmp.eq.s32.totalorder %s20, 0
    %p146 = por %p144, %p145
    %p147 = scmp.ne.s32.totalorder %s135, %s136
    %p148 = scmp.eq.s32.totalorder %s21, 1
    %p149 = por %p147, %p148
    %p151 = scmp.ne.s32.totalorder %s136, %s150
    %p152 = scmp.eq.s32.totalorder %s21, 0
    %p153 = por %p151, %p152
    %s155 = sadd.s32 %s154, 1
    %p158 = scmp.eq.s32.totalorder %s15, 1
    %p159 = scmp.ne.s32.totalorder %s154, %s156
    %p160 = scmp.eq.s32.totalorder %s15, 0
    %p161 = por %p159, %p160
    %p162 = scmp.ne.s32.totalorder %s154, %s156
    %p163 = scmp.eq.s32.totalorder %s20, 1
    %p164 = por %p162, %p163
    %p165 = scmp.ne.s32.totalorder %s156, %s157
    %p166 = scmp.eq.s32.totalorder %s20, 0
    %p167 = por %p165, %p166
    %p168 = scmp.ne.s32.totalorder %s156, %s157
    %p169 = scmp.eq.s32.totalorder %s21, 1
    %p170 = por %p168, %p169
    %p172 = scmp.ne.s32.totalorder %s157, %s171
    %p173 = scmp.eq.s32.totalorder %s21, 0
    %p174 = por %p172, %p173
    %s176 = sadd.s32 %s175, 1
    %p179 = scmp.eq.s32.totalorder %s15, 1
    %p180 = scmp.ne.s32.totalorder %s175, %s177
    %p181 = scmp.eq.s32.totalorder %s15, 0
    %p182 = por %p180, %p181
    %p183 = scmp.ne.s32.totalorder %s175, %s177
    %p184 = scmp.eq.s32.totalorder %s20, 1
    %p185 = por %p183, %p184
    %p186 = scmp.ne.s32.totalorder %s177, %s178
    %p187 = scmp.eq.s32.totalorder %s20, 0
    %p188 = por %p186, %p187
    %p189 = scmp.ne.s32.totalorder %s177, %s178
    %p190 = scmp.eq.s32.totalorder %s21, 1
    %p191 = por %p189, %p190
    %p193 = scmp.ne.s32.totalorder %s178, %s192
    %p194 = scmp.eq.s32.totalorder %s21, 0
    %p195 = por %p193, %p194
    %s197 = sadd.s32 %s196, 1
    %p200 = scmp.eq.s32.totalorder %s15, 1
    %p201 = scmp.ne.s32.totalorder %s196, %s198
    %p202 = scmp.eq.s32.totalorder %s15, 0
    %p203 = por %p201, %p202
    %p204 = scmp.ne.s32.totalorder %s196, %s198
    %p205 = scmp.eq.s32.totalorder %s20, 1
    %p206 = por %p204, %p205
    %p207 = scmp.ne.s32.totalorder %s198, %s199
    %p208 = scmp.eq.s32.totalorder %s20, 0
    %p209 = por %p207, %p208
    %p210 = scmp.ne.s32.totalorder %s198, %s199
    %p211 = scmp.eq.s32.totalorder %s21, 1
    %p212 = por %p210, %p211
    %p214 = scmp.ne.s32.totalorder %s199, %s213
    %p215 = scmp.eq.s32.totalorder %s21, 0
    %p216 = por %p214, %p215
    %s217 = ssub.s32 %s15, %s22
    %p218 = scmp.eq.s32.totalorder %s217, 0
    %s220 = sadd.s32 %s219, 1
    %s221 = scalar_select %p218, %s219, %s220
    %p224 = pneg %p218
    %p225 = scmp.eq.s32.totalorder %s15, 1
    %p226 = por %p224, %p225
    %p227 = scmp.ne.s32.totalorder %s219, %s222
    %p228 = scmp.eq.s32.totalorder %s15, 0
    %p229 = por %p227, %p228
    %p230 = scmp.ne.s32.totalorder %s219, %s222
    %p231 = scmp.eq.s32.totalorder %s20, 1
    %p232 = por %p230, %p231
    %p233 = scmp.ne.s32.totalorder %s222, %s223
    %p234 = scmp.eq.s32.totalorder %s20, 0
    %p235 = por %p233, %p234
    %p236 = scmp.ne.s32.totalorder %s222, %s223
    %p237 = scmp.eq.s32.totalorder %s21, 1
    %p238 = por %p236, %p237
    %p240 = scmp.ne.s32.totalorder %s223, %s239
    %p241 = scmp.eq.s32.totalorder %s21, 0
    %p242 = por %p240, %p241
    %p243 = scmp.le.s32.totalorder 1, %s15
    %p244 = scmp.lt.s32.totalorder %s15, 3
    %p245 = pnand %p243, %p244
    %p246 = pneg %p245
    // Predicated region
    $region9: #{tpu_custom_call.1} parent=5 // pred_check
      _
    $region10: #{tpu_custom_call.1} parent=5 // pred_check_branch
      %248 = sbr.rel (%p245) target = $region12
    $region11: #{tpu_custom_call.1} parent=5 // pred_region
      %s249 = ssub.s32 %s15, 1
      // Predicated region
      $region13: #{tpu_custom_call.1} parent=11 // pred_check
        %p250 = pneg %p62
      $region14: #{tpu_custom_call.1} parent=11 // pred_check_branch
        %252 = sbr.rel (%p250) target = $region16
      $region15: #{tpu_custom_call.1} parent=11 // pred_region
        _
      $region16: #{tpu_custom_call.1} parent=11 // pred_fallthru
        _
      // Predicated region
      $region17: #{tpu_custom_call.1} parent=11 // pred_check
        %p253 = pneg %p83
      $region18: #{tpu_custom_call.1} parent=11 // pred_check_branch
        %255 = sbr.rel (%p253) target = $region20
      $region19: #{tpu_custom_call.1} parent=11 // pred_region
        _
      $region20: #{tpu_custom_call.1} parent=11 // pred_fallthru
        _
      // Predicated region
      $region21: #{tpu_custom_call.1} parent=11 // pred_check
        %p256 = pneg %p104
      $region22: #{tpu_custom_call.1} parent=11 // pred_check_branch
        %258 = sbr.rel (%p256) target = $region24
      $region23: #{tpu_custom_call.1} parent=11 // pred_region
        _
      $region24: #{tpu_custom_call.1} parent=11 // pred_fallthru
        _
      // Predicated region
      $region25: #{tpu_custom_call.1} parent=11 // pred_check
        %p259 = pneg %p125
      $region26: #{tpu_custom_call.1} parent=11 // pred_check_branch
        %261 = sbr.rel (%p259) target = $region28
      $region27: #{tpu_custom_call.1} parent=11 // pred_region
        _
      $region28: #{tpu_custom_call.1} parent=11 // pred_fallthru
        _
      // Predicated region
      $region29: #{tpu_custom_call.1} parent=11 // pred_check
        %p262 = pneg %p146
      $region30: #{tpu_custom_call.1} parent=11 // pred_check_branch
        %264 = sbr.rel (%p262) target = $region32
      $region31: #{tpu_custom_call.1} parent=11 // pred_region
        _
      $region32: #{tpu_custom_call.1} parent=11 // pred_fallthru
        _
      // Predicated region
      $region33: #{tpu_custom_call.1} parent=11 // pred_check
        %p265 = pneg %p167
      $region34: #{tpu_custom_call.1} parent=11 // pred_check_branch
        %267 = sbr.rel (%p265) target = $region36
      $region35: #{tpu_custom_call.1} parent=11 // pred_region
        _
      $region36: #{tpu_custom_call.1} parent=11 // pred_fallthru
        _
      // Predicated region
      $region37: #{tpu_custom_call.1} parent=11 // pred_check
        %p268 = pneg %p188
      $region38: #{tpu_custom_call.1} parent=11 // pred_check_branch
        %270 = sbr.rel (%p268) target = $region40
      $region39: #{tpu_custom_call.1} parent=11 // pred_region
        _
      $region40: #{tpu_custom_call.1} parent=11 // pred_fallthru
        _
      // Predicated region
      $region41: #{tpu_custom_call.1} parent=11 // pred_check
        %p271 = pneg %p209
      $region42: #{tpu_custom_call.1} parent=11 // pred_check_branch
        %273 = sbr.rel (%p271) target = $region44
      $region43: #{tpu_custom_call.1} parent=11 // pred_region
        _
      $region44: #{tpu_custom_call.1} parent=11 // pred_fallthru
        _
    $region12: #{tpu_custom_call.1} parent=5 // pred_fallthru
      _
    %p274 = scmp.lt.s32.totalorder %s15, 2
    // Predicated region
    $region45: #{tpu_custom_call.1} parent=5 // pred_check
      %p275 = pneg %p274
    $region46: #{tpu_custom_call.1} parent=5 // pred_check_branch
      %277 = sbr.rel (%p275) target = $region48
    $region47: #{tpu_custom_call.1} parent=5 // pred_region
      // Predicated region
      $region49: #{tpu_custom_call.1} parent=47 // pred_check
        %p278 = pneg %p35
      $region50: #{tpu_custom_call.1} parent=47 // pred_check_branch
        %280 = sbr.rel (%p278) target = $region52
      $region51: #{tpu_custom_call.1} parent=47 // pred_region
        %p281 = scmp.lt.s32.totalorder %s15, 1
        %s282 = scalar_select %p281, %s15, 1
        %s283 = smul.addr %s282, 8
        %s284 = scalar_lea.vmem %s0, %s283
      $region52: #{tpu_custom_call.1} parent=47 // pred_fallthru
        _
    $region48: #{tpu_custom_call.1} parent=5 // pred_fallthru
      _
    %p285 = scmp.le.s32.totalorder 1, %s15
    %p286 = scmp.lt.s32.totalorder %s15, 3
    %p287 = pnand %p285, %p286
    %p288 = pneg %p287
    // Predicated region
    $region53: #{tpu_custom_call.1} parent=5 // pred_check
      _
    $region54: #{tpu_custom_call.1} parent=5 // pred_check_branch
      %290 = sbr.rel (%p287) target = $region56
    $region55: #{tpu_custom_call.1} parent=5 // pred_region
      %s291 = ssub.s32 %s15, 1
      %p292 = scmp.lt.s32.totalorder %s20, 1
      %s293 = scalar_select %p292, %s20, 1
      %s294 = smul.addr %s293, 8
      %s295 = scalar_lea.vmem %s0, %s294
      %p296 = pneg %p41
      %p297 = pneg %p38
      %p298 = pneg %p62
      %p299 = pneg %p59
      %p300 = pneg %p83
      %p301 = pneg %p80
      %p302 = pneg %p104
      %p303 = pneg %p101
      %p304 = pneg %p125
      %p305 = pneg %p122
      %p306 = pneg %p146
      %p307 = pneg %p143
      %p308 = pneg %p167
      %p309 = pneg %p164
      %p310 = pneg %p188
      %p311 = pneg %p185
      %p312 = pneg %p209
      %p313 = pneg %p206
      %p314 = pneg %p235
      %p315 = pneg %p232
      %p316 = scmp.lt.s32.totalorder %s20, 1
      %s317 = scalar_select %p316, %s20, 1
      %s318 = smul.addr %s317, 8
      %s319 = scalar_lea.vmem %s9, %s318
      %p320 = scmp.lt.s32.totalorder %s20, 1
      %s321 = scalar_select %p320, %s20, 1
      %s322 = smul.addr %s321, 8
      %s323 = scalar_lea.vmem %s0, %s322
      %p324 = scmp.lt.s32.totalorder %s20, 1
      %s325 = scalar_select %p324, %s20, 1
      %s326 = smul.addr %s325, 8
      %s327 = scalar_lea.vmem %s9, %s326
      %v328 = vld [vmem:[%s323] sm:$0xff]
      %v329 = vld [vmem:[%s1] sm:$0xf]
      %v330 = vld [vmem:[%s2] sm:$0x1]
      %v332 = vlaneseq
      %v333 = vshrl.u32 %v332, 7
      %v334 = vsub.s32 0, %v333
      %v335 = vrot.slane %v330, %v334
      %vm337 = vcmask 31744
      %v339 = vsel %vm337, %v328, 0
      %vm341 = vcmask 1043456
      %v343 = vsel %vm341, %v329, 0
      %345 = vmatprep.subr.mxu0 0.0
      %346 = vmatpush1.msra.mxu0 %v343
      %347 = vmatprep.subr.mxu0 0.0
      %348 = vmatpush1.msra.mxu0 0.0
      %349 = vmatprep.subr.mxu0 0.0
      %350 = vmatpush1.msra.mxu0 0.0
      %351 = vmatprep.subr.mxu0 0.0
      %352 = vmatpush1.msra.mxu0 0.0
      %353 = vmatprep.subr.mxu0 0.0
      %354 = vmatpush1.msra.mxu0 0.0
      %355 = vmatprep.subr.mxu0 0.0
      %356 = vmatpush1.msra.mxu0 0.0
      %357 = vmatprep.subr.mxu0 0.0
      %358 = vmatpush1.msra.mxu0 0.0
      %359 = vmatprep.subr.mxu0 0.0
      %360 = vmatpush1.msra.mxu0 0.0
      %361 = vmatprep.subr.mxu0 0.0
      %362 = vmatpush1.msra.mxu0 0.0
      %363 = vmatprep.subr.mxu0 0.0
      %364 = vmatpush1.msra.mxu0 0.0
      %365 = vmatprep.subr.mxu0 0.0
      %366 = vmatpush1.msra.mxu0 0.0
      %367 = vmatprep.subr.mxu0 0.0
      %368 = vmatpush1.msra.mxu0 0.0
      %369 = vmatprep.subr.mxu0 0.0
      %370 = vmatpush1.msra.mxu0 0.0
      %371 = vmatprep.subr.mxu0 0.0
      %372 = vmatpush1.msra.mxu0 0.0
      %373 = vmatprep.subr.mxu0 0.0
      %374 = vmatpush1.msra.mxu0 0.0
      %375 = vmatprep.subr.mxu0 0.0
      %376 = vmatpush1.msra.mxu0 0.0
      %377 = vmatprep.subr.mxu0 0.0
      %378 = vmatpush1.msra.mxu0 0.0
      %379 = vmatprep.subr.mxu0 0.0
      %380 = vmatpush1.msra.mxu0 0.0
      %381 = vmatprep.subr.mxu0 0.0
      %382 = vmatpush1.msra.mxu0 0.0
      %383 = vmatprep.subr.mxu0 0.0
      %384 = vmatpush1.msra.mxu0 0.0
      %385 = vmatprep.subr.mxu0 0.0
      %386 = vmatpush1.msra.mxu0 0.0
      %387 = vmatprep.subr.mxu0 0.0
      %388 = vmatpush1.msra.mxu0 0.0
      %389 = vmatprep.subr.mxu0 0.0
      %390 = vmatpush1.msra.mxu0 0.0
      %391 = vmatprep.subr.mxu0 0.0
      %392 = vmatpush1.msra.mxu0 0.0
      %393 = vmatprep.subr.mxu0 0.0
      %394 = vmatpush1.msra.mxu0 0.0
      %395 = vmatprep.subr.mxu0 0.0
      %396 = vmatpush1.msra.mxu0 0.0
      %397 = vmatprep.subr.mxu0 0.0
      %398 = vmatpush1.msra.mxu0 0.0
      %399 = vmatprep.subr.mxu0 0.0
      %400 = vmatpush1.msra.mxu0 0.0
      %401 = vmatprep.subr.mxu0 0.0
      %402 = vmatpush1.msra.mxu0 0.0
      %403 = vmatprep.subr.mxu0 0.0
      %404 = vmatpush1.msra.mxu0 0.0
      %405 = vmatprep.subr.mxu0 0.0
      %406 = vmatpush1.msra.mxu0 0.0
      %407 = vmatprep.subr.mxu0 0.0
      %408 = vmatpush1.msra.mxu0 0.0
      %409 = vmatprep.mubr.f32.mxu0 0.0
      %410 = vmatmul.mubr.f32.gmra.mrb[0].mxu0 %v339
      %v411 = vpop.f32.mrb[0].mxu0
      %v412 = vadd.f32 %v335, %v411
      %v413 = vpop.f32.mrb[0].mxu0
      %414 = vdwg.mxu0
      %v415 = vmax.f32 %v412, 0.0
      %v416 = vld [vmem:[%s3] sm:$0xff]
      %v417 = vld [vmem:[%s3 + $0x8] sm:$0xff]
      %v418 = vld [vmem:[%s3 + $0x10] sm:$0xff]
      %v419 = vld [vmem:[%s3 + $0x18] sm:$0xff]
      %v420 = vld [vmem:[%s4] sm:$0x1]
      %v422 = vlaneseq
      %v423 = vshrl.u32 %v422, 7
      %v424 = vsub.s32 0, %v423
      %v425 = vrot.slane %v420, %v424
      %vm427 = vcmask 261120
      %v429 = vsel %vm427, %v415, 0
      %431 = vmatprep.subr.mxu0 0.0
      %432 = vmatpush1.msra.mxu0 %v416
      %433 = vmatprep.subr.mxu0 0.0
      %434 = vmatpush1.msra.mxu0 %v417
      %435 = vmatprep.subr.mxu0 0.0
      %436 = vmatpush1.msra.mxu0 %v418
      %437 = vmatprep.subr.mxu0 0.0
      %438 = vmatpush1.msra.mxu0 %v419
      %439 = vmatprep.subr.mxu0 0.0
      %440 = vmatpush1.msra.mxu0 0.0
      %441 = vmatprep.subr.mxu0 0.0
      %442 = vmatpush1.msra.mxu0 0.0
      %443 = vmatprep.subr.mxu0 0.0
      %444 = vmatpush1.msra.mxu0 0.0
      %445 = vmatprep.subr.mxu0 0.0
      %446 = vmatpush1.msra.mxu0 0.0
      %447 = vmatprep.subr.mxu0 0.0
      %448 = vmatpush1.msra.mxu0 0.0
      %449 = vmatprep.subr.mxu0 0.0
      %450 = vmatpush1.msra.mxu0 0.0
      %451 = vmatprep.subr.mxu0 0.0
      %452 = vmatpush1.msra.mxu0 0.0
      %453 = vmatprep.subr.mxu0 0.0
      %454 = vmatpush1.msra.mxu0 0.0
      %455 = vmatprep.subr.mxu0 0.0
      %456 = vmatpush1.msra.mxu0 0.0
      %457 = vmatprep.subr.mxu0 0.0
      %458 = vmatpush1.msra.mxu0 0.0
      %459 = vmatprep.subr.mxu0 0.0
      %460 = vmatpush1.msra.mxu0 0.0
      %461 = vmatprep.subr.mxu0 0.0
      %462 = vmatpush1.msra.mxu0 0.0
      %463 = vmatprep.subr.mxu0 0.0
      %464 = vmatpush1.msra.mxu0 0.0
      %465 = vmatprep.subr.mxu0 0.0
      %466 = vmatpush1.msra.mxu0 0.0
      %467 = vmatprep.subr.mxu0 0.0
      %468 = vmatpush1.msra.mxu0 0.0
      %469 = vmatprep.subr.mxu0 0.0
      %470 = vmatpush1.msra.mxu0 0.0
      %471 = vmatprep.subr.mxu0 0.0
      %472 = vmatpush1.msra.mxu0 0.0
      %473 = vmatprep.subr.mxu0 0.0
      %474 = vmatpush1.msra.mxu0 0.0
      %475 = vmatprep.subr.mxu0 0.0
      %476 = vmatpush1.msra.mxu0 0.0
      %477 = vmatprep.subr.mxu0 0.0
      %478 = vmatpush1.msra.mxu0 0.0
      %479 = vmatprep.subr.mxu0 0.0
      %480 = vmatpush1.msra.mxu0 0.0
      %481 = vmatprep.subr.mxu0 0.0
      %482 = vmatpush1.msra.mxu0 0.0
      %483 = vmatprep.subr.mxu0 0.0
      %484 = vmatpush1.msra.mxu0 0.0
      %485 = vmatprep.subr.mxu0 0.0
      %486 = vmatpush1.msra.mxu0 0.0
      %487 = vmatprep.subr.mxu0 0.0
      %488 = vmatpush1.msra.mxu0 0.0
      %489 = vmatprep.subr.mxu0 0.0
      %490 = vmatpush1.msra.mxu0 0.0
      %491 = vmatprep.subr.mxu0 0.0
      %492 = vmatpush1.msra.mxu0 0.0
      %493 = vmatprep.subr.mxu0 0.0
      %494 = vmatpush1.msra.mxu0 0.0
      %495 = vmatprep.mubr.f32.mxu0 0.0
      %496 = vmatmul.mubr.f32.gmra.mrb[0].mxu0 %v429
      %v497 = vpop.f32.mrb[0].mxu0
      %v498 = vadd.f32 %v425, %v497
      %v499 = vpop.f32.mrb[0].mxu0
      %500 = vdwg.mxu0
      %v501 = vmax.f32 %v498, 0.0
      %v502 = vld [vmem:[%s5] sm:$0xff]
      %v503 = vld [vmem:[%s5 + $0x8] sm:$0xff]
      %v504 = vld [vmem:[%s5 + $0x10] sm:$0xff]
      %v505 = vld [vmem:[%s5 + $0x18] sm:$0xff]
      %v506 = vld [vmem:[%s5 + $0x20] sm:$0xff]
      %v507 = vld [vmem:[%s5 + $0x28] sm:$0xff]
      %v508 = vld [vmem:[%s5 + $0x30] sm:$0xff]
      %v509 = vld [vmem:[%s5 + $0x38] sm:$0xff]
      %v510 = vld [vmem:[%s6] sm:$0x1]
      %v512 = vlaneseq
      %v513 = vshrl.u32 %v512, 7
      %v514 = vsub.s32 0, %v513
      %v515 = vrot.slane %v510, %v514
      %vm517 = vcmask 523264
      %v519 = vsel %vm517, %v501, 0
      %521 = vmatprep.subr.mxu0 0.0
      %522 = vmatpush1.msra.mxu0 %v502
      %523 = vmatprep.subr.mxu0 0.0
      %524 = vmatpush1.msra.mxu0 %v503
      %525 = vmatprep.subr.mxu0 0.0
      %526 = vmatpush1.msra.mxu0 %v504
      %527 = vmatprep.subr.mxu0 0.0
      %528 = vmatpush1.msra.mxu0 %v505
      %529 = vmatprep.subr.mxu0 0.0
      %530 = vmatpush1.msra.mxu0 %v506
      %531 = vmatprep.subr.mxu0 0.0
      %532 = vmatpush1.msra.mxu0 %v507
      %533 = vmatprep.subr.mxu0 0.0
      %534 = vmatpush1.msra.mxu0 %v508
      %535 = vmatprep.subr.mxu0 0.0
      %536 = vmatpush1.msra.mxu0 %v509
      %537 = vmatprep.subr.mxu0 0.0
      %538 = vmatpush1.msra.mxu0 0.0
      %539 = vmatprep.subr.mxu0 0.0
      %540 = vmatpush1.msra.mxu0 0.0
      %541 = vmatprep.subr.mxu0 0.0
      %542 = vmatpush1.msra.mxu0 0.0
      %543 = vmatprep.subr.mxu0 0.0
      %544 = vmatpush1.msra.mxu0 0.0
      %545 = vmatprep.subr.mxu0 0.0
      %546 = vmatpush1.msra.mxu0 0.0
      %547 = vmatprep.subr.mxu0 0.0
      %548 = vmatpush1.msra.mxu0 0.0
      %549 = vmatprep.subr.mxu0 0.0
      %550 = vmatpush1.msra.mxu0 0.0
      %551 = vmatprep.subr.mxu0 0.0
      %552 = vmatpush1.msra.mxu0 0.0
      %553 = vmatprep.subr.mxu0 0.0
      %554 = vmatpush1.msra.mxu0 0.0
      %555 = vmatprep.subr.mxu0 0.0
      %556 = vmatpush1.msra.mxu0 0.0
      %557 = vmatprep.subr.mxu0 0.0
      %558 = vmatpush1.msra.mxu0 0.0
      %559 = vmatprep.subr.mxu0 0.0
      %560 = vmatpush1.msra.mxu0 0.0
      %561 = vmatprep.subr.mxu0 0.0
      %562 = vmatpush1.msra.mxu0 0.0
      %563 = vmatprep.subr.mxu0 0.0
      %564 = vmatpush1.msra.mxu0 0.0
      %565 = vmatprep.subr.mxu0 0.0
      %566 = vmatpush1.msra.mxu0 0.0
      %567 = vmatprep.subr.mxu0 0.0
      %568 = vmatpush1.msra.mxu0 0.0
      %569 = vmatprep.subr.mxu0 0.0
      %570 = vmatpush1.msra.mxu0 0.0
      %571 = vmatprep.subr.mxu0 0.0
      %572 = vmatpush1.msra.mxu0 0.0
      %573 = vmatprep.subr.mxu0 0.0
      %574 = vmatpush1.msra.mxu0 0.0
      %575 = vmatprep.subr.mxu0 0.0
      %576 = vmatpush1.msra.mxu0 0.0
      %577 = vmatprep.subr.mxu0 0.0
      %578 = vmatpush1.msra.mxu0 0.0
      %579 = vmatprep.subr.mxu0 0.0
      %580 = vmatpush1.msra.mxu0 0.0
      %581 = vmatprep.subr.mxu0 0.0
      %582 = vmatpush1.msra.mxu0 0.0
      %583 = vmatprep.subr.mxu0 0.0
      %584 = vmatpush1.msra.mxu0 0.0
      %585 = vmatprep.mubr.f32.mxu0 0.0
      %586 = vmatmul.mubr.f32.gmra.mrb[0].mxu0 %v519
      %v587 = vpop.f32.mrb[0].mxu0
      %v588 = vadd.f32 %v515, %v587
      %v589 = vpop.f32.mrb[0].mxu0
      %590 = vdwg.mxu0
      %v591 = vmax.f32 %v588, 0.0
      %v592 = vld [vmem:[%s7] sm:$0xff]
      %v593 = vld [vmem:[%s7 + $0x8] sm:$0xff]
      %v594 = vld [vmem:[%s7 + $0x10] sm:$0xff]
      %v595 = vld [vmem:[%s7 + $0x18] sm:$0xff]
      %v596 = vld [vmem:[%s8] sm:$0x1]
      %v598 = vlaneseq
      %v599 = vshrl.u32 %v598, 7
      %v600 = vsub.s32 0, %v599
      %v601 = vrot.slane %v596, %v600
      %v604 = vsel %vm427, %v591, 0
      %606 = vmatprep.subr.mxu0 0.0
      %607 = vmatpush1.msra.mxu0 %v592
      %608 = vmatprep.subr.mxu0 0.0
      %609 = vmatpush1.msra.mxu0 %v593
      %610 = vmatprep.subr.mxu0 0.0
      %611 = vmatpush1.msra.mxu0 %v594
      %612 = vmatprep.subr.mxu0 0.0
      %613 = vmatpush1.msra.mxu0 %v595
      %614 = vmatprep.subr.mxu0 0.0
      %615 = vmatpush1.msra.mxu0 0.0
      %616 = vmatprep.subr.mxu0 0.0
      %617 = vmatpush1.msra.mxu0 0.0
      %618 = vmatprep.subr.mxu0 0.0
      %619 = vmatpush1.msra.mxu0 0.0
      %620 = vmatprep.subr.mxu0 0.0
      %621 = vmatpush1.msra.mxu0 0.0
      %622 = vmatprep.subr.mxu0 0.0
      %623 = vmatpush1.msra.mxu0 0.0
      %624 = vmatprep.subr.mxu0 0.0
      %625 = vmatpush1.msra.mxu0 0.0
      %626 = vmatprep.subr.mxu0 0.0
      %627 = vmatpush1.msra.mxu0 0.0
      %628 = vmatprep.subr.mxu0 0.0
      %629 = vmatpush1.msra.mxu0 0.0
      %630 = vmatprep.subr.mxu0 0.0
      %631 = vmatpush1.msra.mxu0 0.0
      %632 = vmatprep.subr.mxu0 0.0
      %633 = vmatpush1.msra.mxu0 0.0
      %634 = vmatprep.subr.mxu0 0.0
      %635 = vmatpush1.msra.mxu0 0.0
      %636 = vmatprep.subr.mxu0 0.0
      %637 = vmatpush1.msra.mxu0 0.0
      %638 = vmatprep.subr.mxu0 0.0
      %639 = vmatpush1.msra.mxu0 0.0
      %640 = vmatprep.subr.mxu0 0.0
      %641 = vmatpush1.msra.mxu0 0.0
      %642 = vmatprep.subr.mxu0 0.0
      %643 = vmatpush1.msra.mxu0 0.0
      %644 = vmatprep.subr.mxu0 0.0
      %645 = vmatpush1.msra.mxu0 0.0
      %646 = vmatprep.subr.mxu0 0.0
      %647 = vmatpush1.msra.mxu0 0.0
      %648 = vmatprep.subr.mxu0 0.0
      %649 = vmatpush1.msra.mxu0 0.0
      %650 = vmatprep.subr.mxu0 0.0
      %651 = vmatpush1.msra.mxu0 0.0
      %652 = vmatprep.subr.mxu0 0.0
      %653 = vmatpush1.msra.mxu0 0.0
      %654 = vmatprep.subr.mxu0 0.0
      %655 = vmatpush1.msra.mxu0 0.0
      %656 = vmatprep.subr.mxu0 0.0
      %657 = vmatpush1.msra.mxu0 0.0
      %658 = vmatprep.subr.mxu0 0.0
      %659 = vmatpush1.msra.mxu0 0.0
      %660 = vmatprep.subr.mxu0 0.0
      %661 = vmatpush1.msra.mxu0 0.0
      %662 = vmatprep.subr.mxu0 0.0
      %663 = vmatpush1.msra.mxu0 0.0
      %664 = vmatprep.subr.mxu0 0.0
      %665 = vmatpush1.msra.mxu0 0.0
      %666 = vmatprep.subr.mxu0 0.0
      %667 = vmatpush1.msra.mxu0 0.0
      %668 = vmatprep.subr.mxu0 0.0
      %669 = vmatpush1.msra.mxu0 0.0
      %670 = vmatprep.mubr.f32.mxu0 0.0
      %671 = vmatmul.mubr.f32.gmra.mrb[0].mxu0 %v604
      %v672 = vpop.f32.mrb[0].mxu0
      %v673 = vadd.f32 %v601, %v672
      %v674 = vpop.f32.mrb[0].mxu0
      %675 = vdwg.mxu0
      %v676 = vmax.f32 %v673, 0.0
      %vm677 = vcmask 23552
      %678 = vst.msk [vmem:[%s327] sm:$0xff] %vm677, %v676
      %p679 = scmp.lt.s32.totalorder %s20, 1
      %s680 = scalar_select %p679, %s20, 1
      %s681 = smul.addr %s680, 8
      %s682 = scalar_lea.vmem %s9, %s681
      // Predicated region
      $region57: #{tpu_custom_call.1} parent=55 // pred_check
        %p683 = pneg %p232
      $region58: #{tpu_custom_call.1} parent=55 // pred_check_branch
        %685 = sbr.rel (%p683) target = $region60
      $region59: #{tpu_custom_call.1} parent=55 // pred_region
        _
      $region60: #{tpu_custom_call.1} parent=55 // pred_fallthru
        _
    $region56: #{tpu_custom_call.1} parent=5 // pred_fallthru
      _
    %p686 = scmp.le.s32.totalorder 2, %s15
    // Predicated region
    $region61: #{tpu_custom_call.1} parent=5 // pred_check
      %p687 = pneg %p686
    $region62: #{tpu_custom_call.1} parent=5 // pred_check_branch
      %689 = sbr.rel (%p687) target = $region64
    $region63: #{tpu_custom_call.1} parent=5 // pred_region
      %s690 = ssub.s32 %s15, 2
      // Predicated region
      $region65: #{tpu_custom_call.1} parent=63 // pred_check
        %p691 = pneg %p238
      $region66: #{tpu_custom_call.1} parent=63 // pred_check_branch
        %693 = sbr.rel (%p691) target = $region68
      $region67: #{tpu_custom_call.1} parent=63 // pred_region
        %p694 = scmp.lt.s32.totalorder %s21, 1
        %s695 = scalar_select %p694, %s21, 1
        %s696 = smul.addr %s695, 8
        %s697 = scalar_lea.vmem %s9, %s696
      $region68: #{tpu_custom_call.1} parent=63 // pred_fallthru
        _
    $region64: #{tpu_custom_call.1} parent=5 // pred_fallthru
      _
  $region6: #{tpu_custom_call.1} parent=0 // loop_footer
    %s19 = sadd.s32 1, %s15
  $region7: #{tpu_custom_call.1} parent=0 // loop_footer_branch
    %14 = sbr.rel target = $region3
  $region8: #{tpu_custom_call.1} parent=0 // loop_exit
    _

</llo_original>
